<compile_context>
chip_gen: v7x
topology: tpu7x:2x2x1
jax: 0.10.0
libtpu: 0.0.40
codegen_flags: <defaults>
</compile_context>

<pallas_src>
import jax
import jax.numpy as jnp
from jax.experimental import pallas as pl
from jax.experimental.pallas import tpu as pltpu

IN = 512          # input features
H1 = 256          # first hidden width (already lane aligned)
HP = 128          # padded width for the 100-wide hidden layers and the output
TB_MAX = 1024     # max batch tile: multiple of 256, VMEM-safe on v5e/v6e/v7x


def _round_up(n, m):
    return ((n + m - 1) // m) * m


def _choose_tb(B):
    """Adaptive batch tile.

    Small batches: single tile padded only to a sublane multiple (8 rows).
    Large batches: big tiles (amortize per-step pipeline overhead) while keeping
    at least 2 tiles so dimension_semantics=("parallel",) can shard across the
    two v7x TensorCores."""
    if B <= 512:
        return max(8, _round_up(B, 8))
    return min(TB_MAX, _round_up(pl.cdiv(B, 2), 256))


def _mlp_kernel(x_ref, w1_ref, b1_ref, w2_ref, b2_ref, wh_ref, bh_ref, o_ref):
    # Streamed activations and weights are bf16 (MXU fast path); accumulation is
    # f32 (preferred_element_type).  Bias add + ReLU run in f32 and the bf16 cast
    # for the next layer's dot is fused with the ReLU.
    def layer(h_bf16, w, b, relu):
        acc = jnp.dot(h_bf16, w, preferred_element_type=jnp.float32) + b
        if relu:
            return jnp.maximum(acc, 0.0).astype(jnp.bfloat16)
        return acc  # final layer: keep f32 for the output write

    h = layer(x_ref[...], w1_ref[...], b1_ref[...], True)    # [TB, 256] bf16
    h = layer(h, w2_ref[...], b2_ref[...], True)              # [TB, 128] bf16

    n_hidden = wh_ref.shape[0]                                # 4 stacked 128x128 layers
    for k in range(n_hidden):                                 # static unrolled loop
        h = layer(h, wh_ref[k], bh_ref[k], k < n_hidden - 1)  # last one has no ReLU

    o_ref[...] = h                                            # [TB, 128] f32


def pack_params(params_f32):
    """params_f32: 6 (W_padded[in,out] f32, b_padded[1,out] f32) pairs.
    Returns kernel operands: bf16 weights, f32 biases, 128x128 layers stacked."""
    (w1, b1), (w2, b2) = params_f32[0], params_f32[1]
    wh = jnp.stack([w for w, _ in params_f32[2:]]).astype(jnp.bfloat16)  # [4,128,128]
    bh = jnp.stack([b for _, b in params_f32[2:]])                        # [4,1,128]
    return (w1.astype(jnp.bfloat16), b1, w2.astype(jnp.bfloat16), b2, wh, bh)


def unified_regressor_forward(x, packed, out_dim, tb=None):
    """x: [B, 512] float32 (or bf16).  packed: output of pack_params."""
    assert out_dim <= HP, "out_dim > 128 would need a wider padded output"
    B = x.shape[0]
    if tb is None:
        tb = _choose_tb(B)
    n_tiles = pl.cdiv(B, tb)
    B_pad = n_tiles * tb

    x = x.astype(jnp.bfloat16)                 # halve the dominant HBM stream
    if B_pad != B:
        x = jnp.pad(x, ((0, B_pad - B), (0, 0)))

    w1, b1, w2, b2, wh, bh = packed

    def resident(arr):
        # Same block every grid step -> operand stays pinned in VMEM.
        return pl.BlockSpec(arr.shape, lambda i, _n=arr.ndim: (0,) * _n)

    in_specs = [pl.BlockSpec((tb, IN), lambda i: (i, 0)),
                resident(w1), resident(b1), resident(w2), resident(b2),
                resident(wh), resident(bh)]

    weight_bytes = sum(int(a.size) * a.dtype.itemsize for a in packed)
    cost = pl.CostEstimate(
        flops=2 * B_pad * (IN * H1 + H1 * HP + 4 * HP * HP),
        transcendentals=0,
        bytes_accessed=B_pad * (IN * 2 + HP * 4) + weight_bytes,  # bf16 in, f32 out
    )

    out_padded = pl.pallas_call(
        _mlp_kernel,
        out_shape=jax.ShapeDtypeStruct((B_pad, HP), jnp.float32),
        grid=(n_tiles,),
        in_specs=in_specs,
        out_specs=pl.BlockSpec((tb, HP), lambda i: (i, 0)),
        compiler_params=pltpu.CompilerParams(
            dimension_semantics=("parallel",),      # megacore split on v7x
            vmem_limit_bytes=32 * 1024 * 1024),
        cost_estimate=cost,
    )(x, w1, b1, w2, b2, wh, bh)
    return out_padded[:B, :out_dim]


def init_params(key, out_dim):
    """Deterministic init mimicking nn.Linear default (uniform +/- 1/sqrt(fan_in)).
    Returns 6 padded f32 (W[in_pad,out_pad], b[1,out_pad]) pairs."""
    assert out_dim <= HP
    layer_dims = [(512, 256), (256, 100), (100, 100),
                  (100, 100), (100, 100), (100, out_dim)]
    pad_dims = [(IN, H1), (H1, HP), (HP, HP), (HP, HP), (HP, HP), (HP, HP)]

    params = []
    keys = jax.random.split(key, len(layer_dims) * 2)
    for i, ((fin, fout), (pin, pout)) in enumerate(zip(layer_dims, pad_dims)):
        bound = 1.0 / jnp.sqrt(jnp.float32(fin))
        w = jax.random.uniform(keys[2 * i], (fin, fout),
                               minval=-bound, maxval=bound, dtype=jnp.float32)
        b = jax.random.uniform(keys[2 * i + 1], (fout,),
                               minval=-bound, maxval=bound, dtype=jnp.float32)
        w_pad = jnp.zeros((pin, pout), jnp.float32).at[:fin, :fout].set(w)
        b_pad = jnp.zeros((1, pout), jnp.float32).at[0, :fout].set(b)
        params.append((w_pad, b_pad))
    return params


def reference_forward_f32(x, params_f32, out_dim):
    """Exact (f32) PyTorch-equivalent forward on the padded params."""
    h = x
    for i, (w, b) in enumerate(params_f32):
        h = jnp.dot(h, w) + b
        if i < len(params_f32) - 1:
            h = jnp.maximum(h, 0.0)
    return h[:, :out_dim]


def reference_forward_bf16(x, params_f32, out_dim):
    """Plain-JAX emulation of the kernel's bf16-operand / f32-accumulate math."""
    h = x.astype(jnp.bfloat16)
    for i, (w, b) in enumerate(params_f32):
        h = jnp.dot(h, w.astype(jnp.bfloat16),
                    preferred_element_type=jnp.float32) + b
        if i < len(params_f32) - 1:
            h = jnp.maximum(h, 0.0).astype(jnp.bfloat16)
    return h[:, :out_dim]


if __name__ == "__main__":
    # TODO(synk): forward_index(x, index) references self.models, which the PyTorch
    # module never defines; only forward(x) is implemented here.
    out_dim = 10
    B = 8

    key = jax.random.PRNGKey(0)
    kx, kp = jax.random.split(key)
    x = jax.random.normal(kx, (B, IN), dtype=jnp.float32)

    params_f32 = init_params(kp, out_dim)
    packed = pack_params(params_f32)

    y = unified_regressor_forward(x, packed, out_dim)
    y = jax.block_until_ready(y)
    assert y.shape == (B, out_dim)

    # Tight check vs. plain-JAX emulation of the same bf16-operand compute.
    y_bf16 = reference_forward_bf16(x, params_f32, out_dim)
    assert jnp.allclose(y, y_bf16, atol=2e-3, rtol=2e-3)

    # Loose check vs. the exact f32 (PyTorch-equivalent) forward.
    y_f32 = reference_forward_f32(x, params_f32, out_dim)
    assert jnp.allclose(y, y_f32, atol=5e-2, rtol=5e-2)

    print("KERNEL_OK")
</pallas_src>

<mosaic_0001>
module attributes {stable_mosaic.version = 11 : i64} {
  func.func @_mlp_kernel(%arg0: i32, %arg1: memref<8x512xbf16, #tpu.memory_space<vmem>>, %arg2: memref<512x256xbf16, #tpu.memory_space<vmem>>, %arg3: memref<1x256xf32, #tpu.memory_space<vmem>>, %arg4: memref<256x128xbf16, #tpu.memory_space<vmem>>, %arg5: memref<1x128xf32, #tpu.memory_space<vmem>>, %arg6: memref<4x128x128xbf16, #tpu.memory_space<vmem>>, %arg7: memref<4x1x128xf32, #tpu.memory_space<vmem>>, %arg8: memref<8x128xf32, #tpu.memory_space<vmem>>) attributes {dimension_semantics = [#tpu.dimension_semantics<parallel>], iteration_bounds = array<i64: 1>, scalar_prefetch = 0 : i64, scratch_operands = 0 : i64, tpu.core_type = #tpu.core_type<tc>, window_params = [{transform_indices = @transform_0, window_bounds = array<i64: 8, 512>}, {pipeline_mode = #tpu.pipeline_mode<synchronous>, transform_indices = @transform_1, window_bounds = array<i64: 512, 256>}, {pipeline_mode = #tpu.pipeline_mode<synchronous>, transform_indices = @transform_2, window_bounds = array<i64: 1, 256>}, {pipeline_mode = #tpu.pipeline_mode<synchronous>, transform_indices = @transform_3, window_bounds = array<i64: 256, 128>}, {pipeline_mode = #tpu.pipeline_mode<synchronous>, transform_indices = @transform_4, window_bounds = array<i64: 1, 128>}, {pipeline_mode = #tpu.pipeline_mode<synchronous>, transform_indices = @transform_5, window_bounds = array<i64: 4, 128, 128>}, {pipeline_mode = #tpu.pipeline_mode<synchronous>, transform_indices = @transform_6, window_bounds = array<i64: 4, 1, 128>}, {transform_indices = @transform_7, window_bounds = array<i64: 8, 128>}]} {
    %c0 = arith.constant 0 : index
    %c0_0 = arith.constant 0 : index
    %0 = vector.load %arg1[%c0, %c0_0] : memref<8x512xbf16, #tpu.memory_space<vmem>>, vector<8x512xbf16>
    %c0_1 = arith.constant 0 : index
    %c0_2 = arith.constant 0 : index
    %1 = vector.load %arg2[%c0_1, %c0_2] : memref<512x256xbf16, #tpu.memory_space<vmem>>, vector<512x256xbf16>
    %c0_3 = arith.constant 0 : index
    %c0_4 = arith.constant 0 : index
    %2 = vector.load %arg3[%c0_3, %c0_4] : memref<1x256xf32, #tpu.memory_space<vmem>>, vector<1x256xf32>
    %cst = arith.constant dense<0.000000e+00> : vector<8x256xf32>
    %3 = tpu.matmul %0, %1, %cst {dimension_numbers = #tpu.dot_dimension_numbers<[1], [0], [0], [1], [0, 0, 1, 1], [], []>} : vector<8x512xbf16>, vector<512x256xbf16>, vector<8x256xf32> -> vector<8x256xf32>
    %4 = vector.broadcast %2 : vector<1x256xf32> to vector<8x256xf32>
    %5 = arith.addf %3, %4 : vector<8x256xf32>
    %cst_5 = arith.constant 0.000000e+00 : f32
    %6 = vector.broadcast %cst_5 : f32 to vector<8x256xf32>
    %7 = arith.maximumf %5, %6 : vector<8x256xf32>
    %8 = arith.truncf %7 : vector<8x256xf32> to vector<8x256xbf16>
    %c0_6 = arith.constant 0 : index
    %c0_7 = arith.constant 0 : index
    %9 = vector.load %arg4[%c0_6, %c0_7] : memref<256x128xbf16, #tpu.memory_space<vmem>>, vector<256x128xbf16>
    %c0_8 = arith.constant 0 : index
    %c0_9 = arith.constant 0 : index
    %10 = vector.load %arg5[%c0_8, %c0_9] : memref<1x128xf32, #tpu.memory_space<vmem>>, vector<1x128xf32>
    %cst_10 = arith.constant dense<0.000000e+00> : vector<8x128xf32>
    %11 = tpu.matmul %8, %9, %cst_10 {dimension_numbers = #tpu.dot_dimension_numbers<[1], [0], [0], [1], [0, 0, 1, 1], [], []>} : vector<8x256xbf16>, vector<256x128xbf16>, vector<8x128xf32> -> vector<8x128xf32>
    %12 = vector.broadcast %10 : vector<1x128xf32> to vector<8x128xf32>
    %13 = arith.addf %11, %12 : vector<8x128xf32>
    %cst_11 = arith.constant 0.000000e+00 : f32
    %14 = vector.broadcast %cst_11 : f32 to vector<8x128xf32>
    %15 = arith.maximumf %13, %14 : vector<8x128xf32>
    %16 = arith.truncf %15 : vector<8x128xf32> to vector<8x128xbf16>
    %c0_12 = arith.constant 0 : index
    %c0_13 = arith.constant 0 : index
    %c0_14 = arith.constant 0 : index
    %17 = vector.load %arg6[%c0_12, %c0_13, %c0_14] : memref<4x128x128xbf16, #tpu.memory_space<vmem>>, vector<1x128x128xbf16>
    %18 = vector.shape_cast %17 : vector<1x128x128xbf16> to vector<128x128xbf16>
    %c0_15 = arith.constant 0 : index
    %c0_16 = arith.constant 0 : index
    %c0_17 = arith.constant 0 : index
    %19 = vector.load %arg7[%c0_15, %c0_16, %c0_17] : memref<4x1x128xf32, #tpu.memory_space<vmem>>, vector<1x1x128xf32>
    %20 = vector.shape_cast %19 : vector<1x1x128xf32> to vector<1x128xf32>
    %cst_18 = arith.constant dense<0.000000e+00> : vector<8x128xf32>
    %21 = tpu.matmul %16, %18, %cst_18 {dimension_numbers = #tpu.dot_dimension_numbers<[1], [0], [0], [1], [0, 0, 1, 1], [], []>} : vector<8x128xbf16>, vector<128x128xbf16>, vector<8x128xf32> -> vector<8x128xf32>
    %22 = vector.broadcast %20 : vector<1x128xf32> to vector<8x128xf32>
    %23 = arith.addf %21, %22 : vector<8x128xf32>
    %cst_19 = arith.constant 0.000000e+00 : f32
    %24 = vector.broadcast %cst_19 : f32 to vector<8x128xf32>
    %25 = arith.maximumf %23, %24 : vector<8x128xf32>
    %26 = arith.truncf %25 : vector<8x128xf32> to vector<8x128xbf16>
    %c1 = arith.constant 1 : index
    %c0_20 = arith.constant 0 : index
    %c0_21 = arith.constant 0 : index
    %27 = vector.load %arg6[%c1, %c0_20, %c0_21] : memref<4x128x128xbf16, #tpu.memory_space<vmem>>, vector<1x128x128xbf16>
    %28 = vector.shape_cast %27 : vector<1x128x128xbf16> to vector<128x128xbf16>
    %c1_22 = arith.constant 1 : index
    %c0_23 = arith.constant 0 : index
    %c0_24 = arith.constant 0 : index
    %29 = vector.load %arg7[%c1_22, %c0_23, %c0_24] : memref<4x1x128xf32, #tpu.memory_space<vmem>>, vector<1x1x128xf32>
    %30 = vector.shape_cast %29 : vector<1x1x128xf32> to vector<1x128xf32>
    %cst_25 = arith.constant dense<0.000000e+00> : vector<8x128xf32>
    %31 = tpu.matmul %26, %28, %cst_25 {dimension_numbers = #tpu.dot_dimension_numbers<[1], [0], [0], [1], [0, 0, 1, 1], [], []>} : vector<8x128xbf16>, vector<128x128xbf16>, vector<8x128xf32> -> vector<8x128xf32>
    %32 = vector.broadcast %30 : vector<1x128xf32> to vector<8x128xf32>
    %33 = arith.addf %31, %32 : vector<8x128xf32>
    %cst_26 = arith.constant 0.000000e+00 : f32
    %34 = vector.broadcast %cst_26 : f32 to vector<8x128xf32>
    %35 = arith.maximumf %33, %34 : vector<8x128xf32>
    %36 = arith.truncf %35 : vector<8x128xf32> to vector<8x128xbf16>
    %c2 = arith.constant 2 : index
    %c0_27 = arith.constant 0 : index
    %c0_28 = arith.constant 0 : index
    %37 = vector.load %arg6[%c2, %c0_27, %c0_28] : memref<4x128x128xbf16, #tpu.memory_space<vmem>>, vector<1x128x128xbf16>
    %38 = vector.shape_cast %37 : vector<1x128x128xbf16> to vector<128x128xbf16>
    %c2_29 = arith.constant 2 : index
    %c0_30 = arith.constant 0 : index
    %c0_31 = arith.constant 0 : index
    %39 = vector.load %arg7[%c2_29, %c0_30, %c0_31] : memref<4x1x128xf32, #tpu.memory_space<vmem>>, vector<1x1x128xf32>
    %40 = vector.shape_cast %39 : vector<1x1x128xf32> to vector<1x128xf32>
    %cst_32 = arith.constant dense<0.000000e+00> : vector<8x128xf32>
    %41 = tpu.matmul %36, %38, %cst_32 {dimension_numbers = #tpu.dot_dimension_numbers<[1], [0], [0], [1], [0, 0, 1, 1], [], []>} : vector<8x128xbf16>, vector<128x128xbf16>, vector<8x128xf32> -> vector<8x128xf32>
    %42 = vector.broadcast %40 : vector<1x128xf32> to vector<8x128xf32>
    %43 = arith.addf %41, %42 : vector<8x128xf32>
    %cst_33 = arith.constant 0.000000e+00 : f32
    %44 = vector.broadcast %cst_33 : f32 to vector<8x128xf32>
    %45 = arith.maximumf %43, %44 : vector<8x128xf32>
    %46 = arith.truncf %45 : vector<8x128xf32> to vector<8x128xbf16>
    %c3 = arith.constant 3 : index
    %c0_34 = arith.constant 0 : index
    %c0_35 = arith.constant 0 : index
    %47 = vector.load %arg6[%c3, %c0_34, %c0_35] : memref<4x128x128xbf16, #tpu.memory_space<vmem>>, vector<1x128x128xbf16>
    %48 = vector.shape_cast %47 : vector<1x128x128xbf16> to vector<128x128xbf16>
    %c3_36 = arith.constant 3 : index
    %c0_37 = arith.constant 0 : index
    %c0_38 = arith.constant 0 : index
    %49 = vector.load %arg7[%c3_36, %c0_37, %c0_38] : memref<4x1x128xf32, #tpu.memory_space<vmem>>, vector<1x1x128xf32>
    %50 = vector.shape_cast %49 : vector<1x1x128xf32> to vector<1x128xf32>
    %cst_39 = arith.constant dense<0.000000e+00> : vector<8x128xf32>
    %51 = tpu.matmul %46, %48, %cst_39 {dimension_numbers = #tpu.dot_dimension_numbers<[1], [0], [0], [1], [0, 0, 1, 1], [], []>} : vector<8x128xbf16>, vector<128x128xbf16>, vector<8x128xf32> -> vector<8x128xf32>
    %52 = vector.broadcast %50 : vector<1x128xf32> to vector<8x128xf32>
    %53 = arith.addf %51, %52 : vector<8x128xf32>
    %c0_40 = arith.constant 0 : index
    %c0_41 = arith.constant 0 : index
    %54 = vector.load %arg8[%c0_40, %c0_41] : memref<8x128xf32, #tpu.memory_space<vmem>>, vector<8x128xf32>
    tpu.vector_store %arg8[%c0_40, %c0_41], %53 {strides = array<i32>} : memref<8x128xf32, #tpu.memory_space<vmem>>, vector<8x128xf32>,
    return
  }
  func.func @transform_0(%arg0: i32) -> (i32, i32) {
    %c0_i32 = arith.constant 0 : i32
    %c0_i32_0 = arith.constant 0 : i32
    return %arg0, %c0_i32 : i32, i32
  }
  func.func @transform_1(%arg0: i32) -> (i32, i32) {
    %c0_i32 = arith.constant 0 : i32
    %c0_i32_0 = arith.constant 0 : i32
    %c0_i32_1 = arith.constant 0 : i32
    return %c0_i32, %c0_i32_0 : i32, i32
  }
  func.func @transform_2(%arg0: i32) -> (i32, i32) {
    %c0_i32 = arith.constant 0 : i32
    %c0_i32_0 = arith.constant 0 : i32
    %c0_i32_1 = arith.constant 0 : i32
    return %c0_i32, %c0_i32_0 : i32, i32
  }
  func.func @transform_3(%arg0: i32) -> (i32, i32) {
    %c0_i32 = arith.constant 0 : i32
    %c0_i32_0 = arith.constant 0 : i32
    %c0_i32_1 = arith.constant 0 : i32
    return %c0_i32, %c0_i32_0 : i32, i32
  }
  func.func @transform_4(%arg0: i32) -> (i32, i32) {
    %c0_i32 = arith.constant 0 : i32
    %c0_i32_0 = arith.constant 0 : i32
    %c0_i32_1 = arith.constant 0 : i32
    return %c0_i32, %c0_i32_0 : i32, i32
  }
  func.func @transform_5(%arg0: i32) -> (i32, i32, i32) {
    %c0_i32 = arith.constant 0 : i32
    %c0_i32_0 = arith.constant 0 : i32
    %c0_i32_1 = arith.constant 0 : i32
    %c0_i32_2 = arith.constant 0 : i32
    return %c0_i32, %c0_i32_0, %c0_i32_1 : i32, i32, i32
  }
  func.func @transform_6(%arg0: i32) -> (i32, i32, i32) {
    %c0_i32 = arith.constant 0 : i32
    %c0_i32_0 = arith.constant 0 : i32
    %c0_i32_1 = arith.constant 0 : i32
    %c0_i32_2 = arith.constant 0 : i32
    return %c0_i32, %c0_i32_0, %c0_i32_1 : i32, i32, i32
  }
  func.func @transform_7(%arg0: i32) -> (i32, i32) {
    %c0_i32 = arith.constant 0 : i32
    %c0_i32_0 = arith.constant 0 : i32
    return %arg0, %c0_i32 : i32, i32
  }
}

</mosaic_0001>

<llo_original>
// kernel: tpu_custom_call.1
$region0: #{tpu_custom_call.1}
  #allocation0 [shape = 'u32[]', space=smem, size = 0x4, offset = 0x4, fixed_abs, tag = 'smem constant byte address 0x4 - core index']
  #allocation1 [shape = 'u32[144,128]{1,0:T(1,128)}', space=vmem, size = 0x12000, scoped, tag = 'internal scratch']
  %s0 = inlined_call_operand.hbm [shape: bf16[8,512], index: 0, kind: input, shape index: {}]
  %s1 = inlined_call_operand.hbm [shape: bf16[512,256], index: 1, kind: input, shape index: {}]
  %s2 = inlined_call_operand.vmem [shape: f32[1,256], index: 2, kind: input, shape index: {}]
  %s3 = inlined_call_operand.hbm [shape: bf16[256,128], index: 3, kind: input, shape index: {}]
  %s4 = inlined_call_operand.vmem [shape: f32[1,128], index: 4, kind: input, shape index: {}]
  %s5 = inlined_call_operand.hbm [shape: bf16[4,128,128], index: 5, kind: input, shape index: {}]
  %s6 = inlined_call_operand.vmem [shape: f32[4,1,128], index: 6, kind: input, shape index: {}]
  %s7 = inlined_call_operand.hbm [shape: f32[8,128], index: 7, kind: output, shape index: {}]
  %s8 = sld [smem:[#allocation0]]
  $region54: #{tpu_custom_call.1} parent=0
    _
  %s10 = ssub.s32 1, %s8
  %s11 = scalar_select 0, %s10, %s8
  $region1: #{tpu_custom_call.1} parent=0
    #allocation2 [shape = 'u8[8192]{0}', space=vmem, size = 0x2000, scoped, tag = 'input window, operand 0, single buffered']
    #allocation3 [shape = 's32[1]{0}', space=sflag, size = 0x4, scoped, tag = 'scoped memory for tpu_custom_call.1']
    #allocation4 [shape = 's32[1]{0}', space=sflag, size = 0x4, scoped, tag = 'scoped memory for tpu_custom_call.1']
    #allocation5 [shape = 'u8[262144]{0}', space=vmem, size = 0x40000, scoped, tag = 'input window, operand 1, single buffered']
    #allocation6 [shape = 's32[1]{0}', space=sflag, size = 0x4, scoped, tag = 'scoped memory for tpu_custom_call.1']
    #allocation7 [shape = 'u8[65536]{0}', space=vmem, size = 0x10000, scoped, tag = 'input window, operand 3, single buffered']
    #allocation8 [shape = 'u8[131072]{0}', space=vmem, size = 0x20000, scoped, tag = 'input window, operand 5, single buffered']
    #allocation9 [shape = 's32[1]{0}', space=sflag, size = 0x4, scoped, tag = 'scoped memory for tpu_custom_call.1']
    #allocation10 [shape = 'u8[4096]{0}', space=vmem, size = 0x1000, scoped, tag = 'output window, operand 0, single buffered']
    %12 = vsyncpa [#allocation3], 0
    %13 = vsyncpa [#allocation6], 0
    %14 = vsyncpa [#allocation9], 0
    %15 = vsyncpa [#allocation4], 0
    // Predicated region
    $region2: #{tpu_custom_call.1} parent=1 // pred_check
      _
    $region3: #{tpu_custom_call.1} parent=1 // pred_check_branch
      %17 = sbr.rel (0) target = $region5
    $region4: #{tpu_custom_call.1} parent=1 // pred_region
      %s19 = ssub.s32 256, 256
      %20 = vsyncadd [#allocation3], %s19
      %s22 = sshll.u32 [#allocation2], 4
      %s23 = int_to_ptr.vmem [resolvable:$true] %s22
      %25 = dma.hbm_to_vmem [thread:$0]  %s0, 256, %s23, [#allocation3]
    $region5: #{tpu_custom_call.1} parent=1 // pred_fallthru
      _
    // Predicated region
    $region6: #{tpu_custom_call.1} parent=1 // pred_check
      _
    $region7: #{tpu_custom_call.1} parent=1 // pred_check_branch
      %27 = sbr.rel (0) target = $region9
    $region8: #{tpu_custom_call.1} parent=1 // pred_region
      %s29 = ssub.s32 8192, 8192
      %30 = vsyncadd [#allocation6], %s29
      %s31 = sshll.u32 [#allocation5], 4
      %s32 = int_to_ptr.vmem [resolvable:$true] %s31
      %37 = dma.hbm_to_vmem [thread:$0]  %s1, 8192, %s32, [#allocation6], 128, 128, 8
    $region9: #{tpu_custom_call.1} parent=1 // pred_fallthru
      _
    // Predicated region
    $region10: #{tpu_custom_call.1} parent=1 // pred_check
      _
    $region11: #{tpu_custom_call.1} parent=1 // pred_check_branch
      %39 = sbr.rel (0) target = $region13
    $region12: #{tpu_custom_call.1} parent=1 // pred_region
      _
    $region13: #{tpu_custom_call.1} parent=1 // pred_fallthru
      _
    // Predicated region
    $region14: #{tpu_custom_call.1} parent=1 // pred_check
      _
    $region15: #{tpu_custom_call.1} parent=1 // pred_check_branch
      %41 = sbr.rel (0) target = $region17
    $region16: #{tpu_custom_call.1} parent=1 // pred_region
      %s43 = ssub.s32 2048, 2048
      %44 = vsyncadd [#allocation6], %s43
      %s45 = sshll.u32 [#allocation7], 4
      %s46 = int_to_ptr.vmem [resolvable:$true] %s45
      %51 = dma.hbm_to_vmem [thread:$0]  %s3, 2048, %s46, [#allocation6], 64, 64, 4
    $region17: #{tpu_custom_call.1} parent=1 // pred_fallthru
      _
    // Predicated region
    $region18: #{tpu_custom_call.1} parent=1 // pred_check
      _
    $region19: #{tpu_custom_call.1} parent=1 // pred_check_branch
      %53 = sbr.rel (0) target = $region21
    $region20: #{tpu_custom_call.1} parent=1 // pred_region
      _
    $region21: #{tpu_custom_call.1} parent=1 // pred_fallthru
      _
    // Predicated region
    $region22: #{tpu_custom_call.1} parent=1 // pred_check
      _
    $region23: #{tpu_custom_call.1} parent=1 // pred_check_branch
      %55 = sbr.rel (0) target = $region25
    $region24: #{tpu_custom_call.1} parent=1 // pred_region
      %s57 = ssub.s32 4096, 4096
      %58 = vsyncadd [#allocation9], %s57
      %s59 = sshll.u32 [#allocation8], 4
      %s60 = int_to_ptr.vmem [resolvable:$true] %s59
      %65 = dma.hbm_to_vmem [thread:$0]  %s5, 4096, %s60, [#allocation9], 64, 64, 4
    $region25: #{tpu_custom_call.1} parent=1 // pred_fallthru
      _
    // Predicated region
    $region26: #{tpu_custom_call.1} parent=1 // pred_check
      _
    $region27: #{tpu_custom_call.1} parent=1 // pred_check_branch
      %67 = sbr.rel (0) target = $region29
    $region28: #{tpu_custom_call.1} parent=1 // pred_region
      _
    $region29: #{tpu_custom_call.1} parent=1 // pred_fallthru
      _
    // Predicated region
    $region30: #{tpu_custom_call.1} parent=1 // pred_check
      _
    $region31: #{tpu_custom_call.1} parent=1 // pred_check_branch
      %69 = sbr.rel (0) target = $region33
    $region32: #{tpu_custom_call.1} parent=1 // pred_region
      %70 = dma.done [#allocation3], 256
    $region33: #{tpu_custom_call.1} parent=1 // pred_fallthru
      _
    // Predicated region
    $region34: #{tpu_custom_call.1} parent=1 // pred_check
      _
    $region35: #{tpu_custom_call.1} parent=1 // pred_check_branch
      %72 = sbr.rel (0) target = $region37
    $region36: #{tpu_custom_call.1} parent=1 // pred_region
      %73 = dma.done [#allocation6], 8192
    $region37: #{tpu_custom_call.1} parent=1 // pred_fallthru
      _
    // Predicated region
    $region38: #{tpu_custom_call.1} parent=1 // pred_check
      _
    $region39: #{tpu_custom_call.1} parent=1 // pred_check_branch
      %75 = sbr.rel (0) target = $region41
    $region40: #{tpu_custom_call.1} parent=1 // pred_region
      %76 = dma.done [#allocation6], 2048
    $region41: #{tpu_custom_call.1} parent=1 // pred_fallthru
      _
    // Predicated region
    $region42: #{tpu_custom_call.1} parent=1 // pred_check
      _
    $region43: #{tpu_custom_call.1} parent=1 // pred_check_branch
      %78 = sbr.rel (0) target = $region45
    $region44: #{tpu_custom_call.1} parent=1 // pred_region
      %79 = dma.done [#allocation9], 4096
    $region45: #{tpu_custom_call.1} parent=1 // pred_fallthru
      _
    %v81 = vld [vmem:[#allocation2] sm:$0xff]
    %v82 = vld [vmem:[#allocation2 + $0x8] sm:$0xff]
    %v83 = vld [vmem:[#allocation5] sm:$0xff]
    %v84 = vld [vmem:[#allocation5 + $0x8] sm:$0xff]
    %v85 = vld [vmem:[#allocation5 + $0x10] sm:$0xff]
    %v86 = vld [vmem:[#allocation5 + $0x18] sm:$0xff]
    %v87 = vld [vmem:[#allocation5 + $0x20] sm:$0xff]
    %v88 = vld [vmem:[#allocation5 + $0x28] sm:$0xff]
    %v89 = vld [vmem:[#allocation5 + $0x30] sm:$0xff]
    %v90 = vld [vmem:[#allocation5 + $0x38] sm:$0xff]
    %v91 = vld [vmem:[#allocation5 + $0x40] sm:$0xff]
    %v92 = vld [vmem:[#allocation5 + $0x48] sm:$0xff]
    %v93 = vld [vmem:[#allocation5 + $0x50] sm:$0xff]
    %v94 = vld [vmem:[#allocation5 + $0x58] sm:$0xff]
    %v95 = vld [vmem:[#allocation5 + $0x60] sm:$0xff]
    %v96 = vld [vmem:[#allocation5 + $0x68] sm:$0xff]
    %v97 = vld [vmem:[#allocation5 + $0x70] sm:$0xff]
    %v98 = vld [vmem:[#allocation5 + $0x78] sm:$0xff]
    %v99 = vld [vmem:[#allocation5 + $0x80] sm:$0xff]
    %v100 = vld [vmem:[#allocation5 + $0x88] sm:$0xff]
    %v101 = vld [vmem:[#allocation5 + $0x90] sm:$0xff]
    %v102 = vld [vmem:[#allocation5 + $0x98] sm:$0xff]
    %v103 = vld [vmem:[#allocation5 + $0xa0] sm:$0xff]
    %v104 = vld [vmem:[#allocation5 + $0xa8] sm:$0xff]
    %v105 = vld [vmem:[#allocation5 + $0xb0] sm:$0xff]
    %v106 = vld [vmem:[#allocation5 + $0xb8] sm:$0xff]
    %v107 = vld [vmem:[#allocation5 + $0xc0] sm:$0xff]
    %v108 = vld [vmem:[#allocation5 + $0xc8] sm:$0xff]
    %v109 = vld [vmem:[#allocation5 + $0xd0] sm:$0xff]
    %v110 = vld [vmem:[#allocation5 + $0xd8] sm:$0xff]
    %v111 = vld [vmem:[#allocation5 + $0xe0] sm:$0xff]
    %v112 = vld [vmem:[#allocation5 + $0xe8] sm:$0xff]
    %v113 = vld [vmem:[#allocation5 + $0xf0] sm:$0xff]
    %v114 = vld [vmem:[#allocation5 + $0xf8] sm:$0xff]
    %v115 = vld [vmem:[#allocation5 + $0x100] sm:$0xff]
    %v116 = vld [vmem:[#allocation5 + $0x108] sm:$0xff]
    %v117 = vld [vmem:[#allocation5 + $0x110] sm:$0xff]
    %v118 = vld [vmem:[#allocation5 + $0x118] sm:$0xff]
    %v119 = vld [vmem:[#allocation5 + $0x120] sm:$0xff]
    %v120 = vld [vmem:[#allocation5 + $0x128] sm:$0xff]
    %v121 = vld [vmem:[#allocation5 + $0x130] sm:$0xff]
    %v122 = vld [vmem:[#allocation5 + $0x138] sm:$0xff]
    %v123 = vld [vmem:[#allocation5 + $0x140] sm:$0xff]
    %v124 = vld [vmem:[#allocation5 + $0x148] sm:$0xff]
    %v125 = vld [vmem:[#allocation5 + $0x150] sm:$0xff]
    %v126 = vld [vmem:[#allocation5 + $0x158] sm:$0xff]
    %v127 = vld [vmem:[#allocation5 + $0x160] sm:$0xff]
    %v128 = vld [vmem:[#allocation5 + $0x168] sm:$0xff]
    %v129 = vld [vmem:[#allocation5 + $0x170] sm:$0xff]
    %v130 = vld [vmem:[#allocation5 + $0x178] sm:$0xff]
    %v131 = vld [vmem:[#allocation5 + $0x180] sm:$0xff]
    %v132 = vld [vmem:[#allocation5 + $0x188] sm:$0xff]
    %v133 = vld [vmem:[#allocation5 + $0x190] sm:$0xff]
    %v134 = vld [vmem:[#allocation5 + $0x198] sm:$0xff]
    %v135 = vld [vmem:[#allocation5 + $0x1a0] sm:$0xff]
    %v136 = vld [vmem:[#allocation5 + $0x1a8] sm:$0xff]
    %v137 = vld [vmem:[#allocation5 + $0x1b0] sm:$0xff]
    %v138 = vld [vmem:[#allocation5 + $0x1b8] sm:$0xff]
    %v139 = vld [vmem:[#allocation5 + $0x1c0] sm:$0xff]
    %v140 = vld [vmem:[#allocation5 + $0x1c8] sm:$0xff]
    %v141 = vld [vmem:[#allocation5 + $0x1d0] sm:$0xff]
    %v142 = vld [vmem:[#allocation5 + $0x1d8] sm:$0xff]
    %v143 = vld [vmem:[#allocation5 + $0x1e0] sm:$0xff]
    %v144 = vld [vmem:[#allocation5 + $0x1e8] sm:$0xff]
    %v145 = vld [vmem:[#allocation5 + $0x1f0] sm:$0xff]
    %v146 = vld [vmem:[#allocation5 + $0x1f8] sm:$0xff]
    %v147 = vld [vmem:[%s2] sm:$0x3]
    %v149 = vlaneseq
    %v150 = vshrl.u32 %v149, 7
    %v151 = vsub.s32 0, %v150
    %v152 = vrot.slane %v147, %v151
    %v153 = vlaneseq
    %v154 = vshrl.u32 %v153, 7
    %v155 = vsub.s32 1, %v154
    %v156 = vrot.slane %v147, %v155
    %v161 = vunpack.c.l.b16 %v81
    %v162 = vunpack.c.h.b16 %v81
    %v163 = vunpack.c.l.b16 %v82
    %v164 = vunpack.c.h.b16 %v82
    %v165 = vpack.c.b16 %v161, %v161
    %v166 = vpack.c.b16 %v162, %v162
    %v167 = vpack.c.b16 %v163, %v163
    %v168 = vpack.c.b16 %v164, %v164
    %v237 = vunpack.c.l.b16 %v83
    %v238 = vunpack.c.h.b16 %v83
    %v239 = vunpack.c.l.b16 %v84
    %v240 = vunpack.c.h.b16 %v84
    %v241 = vunpack.c.l.b16 %v85
    %v242 = vunpack.c.h.b16 %v85
    %v243 = vunpack.c.l.b16 %v86
    %v244 = vunpack.c.h.b16 %v86
    %v245 = vunpack.c.l.b16 %v87
    %v246 = vunpack.c.h.b16 %v87
    %v247 = vunpack.c.l.b16 %v88
    %v248 = vunpack.c.h.b16 %v88
    %v249 = vunpack.c.l.b16 %v89
    %v250 = vunpack.c.h.b16 %v89
    %v251 = vunpack.c.l.b16 %v90
    %v252 = vunpack.c.h.b16 %v90
    %v253 = vunpack.c.l.b16 %v91
    %v254 = vunpack.c.h.b16 %v91
    %v255 = vunpack.c.l.b16 %v92
    %v256 = vunpack.c.h.b16 %v92
    %v257 = vunpack.c.l.b16 %v93
    %v258 = vunpack.c.h.b16 %v93
    %v259 = vunpack.c.l.b16 %v94
    %v260 = vunpack.c.h.b16 %v94
    %v261 = vunpack.c.l.b16 %v95
    %v262 = vunpack.c.h.b16 %v95
    %v263 = vunpack.c.l.b16 %v96
    %v264 = vunpack.c.h.b16 %v96
    %v265 = vunpack.c.l.b16 %v97
    %v266 = vunpack.c.h.b16 %v97
    %v267 = vunpack.c.l.b16 %v98
    %v268 = vunpack.c.h.b16 %v98
    %v269 = vunpack.c.l.b16 %v99
    %v270 = vunpack.c.h.b16 %v99
    %v271 = vunpack.c.l.b16 %v100
    %v272 = vunpack.c.h.b16 %v100
    %v273 = vunpack.c.l.b16 %v101
    %v274 = vunpack.c.h.b16 %v101
    %v275 = vunpack.c.l.b16 %v102
    %v276 = vunpack.c.h.b16 %v102
    %v277 = vunpack.c.l.b16 %v103
    %v278 = vunpack.c.h.b16 %v103
    %v279 = vunpack.c.l.b16 %v104
    %v280 = vunpack.c.h.b16 %v104
    %v281 = vunpack.c.l.b16 %v105
    %v282 = vunpack.c.h.b16 %v105
    %v283 = vunpack.c.l.b16 %v106
    %v284 = vunpack.c.h.b16 %v106
    %v285 = vunpack.c.l.b16 %v107
    %v286 = vunpack.c.h.b16 %v107
    %v287 = vunpack.c.l.b16 %v108
    %v288 = vunpack.c.h.b16 %v108
    %v289 = vunpack.c.l.b16 %v109
    %v290 = vunpack.c.h.b16 %v109
    %v291 = vunpack.c.l.b16 %v110
    %v292 = vunpack.c.h.b16 %v110
    %v293 = vunpack.c.l.b16 %v111
    %v294 = vunpack.c.h.b16 %v111
    %v295 = vunpack.c.l.b16 %v112
    %v296 = vunpack.c.h.b16 %v112
    %v297 = vunpack.c.l.b16 %v113
    %v298 = vunpack.c.h.b16 %v113
    %v299 = vunpack.c.l.b16 %v114
    %v300 = vunpack.c.h.b16 %v114
    %v301 = vunpack.c.l.b16 %v115
    %v302 = vunpack.c.h.b16 %v115
    %v303 = vunpack.c.l.b16 %v116
    %v304 = vunpack.c.h.b16 %v116
    %v305 = vunpack.c.l.b16 %v117
    %v306 = vunpack.c.h.b16 %v117
    %v307 = vunpack.c.l.b16 %v118
    %v308 = vunpack.c.h.b16 %v118
    %v309 = vunpack.c.l.b16 %v119
    %v310 = vunpack.c.h.b16 %v119
    %v311 = vunpack.c.l.b16 %v120
    %v312 = vunpack.c.h.b16 %v120
    %v313 = vunpack.c.l.b16 %v121
    %v314 = vunpack.c.h.b16 %v121
    %v315 = vunpack.c.l.b16 %v122
    %v316 = vunpack.c.h.b16 %v122
    %v317 = vunpack.c.l.b16 %v123
    %v318 = vunpack.c.h.b16 %v123
    %v319 = vunpack.c.l.b16 %v124
    %v320 = vunpack.c.h.b16 %v124
    %v321 = vunpack.c.l.b16 %v125
    %v322 = vunpack.c.h.b16 %v125
    %v323 = vunpack.c.l.b16 %v126
    %v324 = vunpack.c.h.b16 %v126
    %v325 = vunpack.c.l.b16 %v127
    %v326 = vunpack.c.h.b16 %v127
    %v327 = vunpack.c.l.b16 %v128
    %v328 = vunpack.c.h.b16 %v128
    %v329 = vunpack.c.l.b16 %v129
    %v330 = vunpack.c.h.b16 %v129
    %v331 = vunpack.c.l.b16 %v130
    %v332 = vunpack.c.h.b16 %v130
    %v333 = vunpack.c.l.b16 %v131
    %v334 = vunpack.c.h.b16 %v131
    %v335 = vunpack.c.l.b16 %v132
    %v336 = vunpack.c.h.b16 %v132
    %v337 = vunpack.c.l.b16 %v133
    %v338 = vunpack.c.h.b16 %v133
    %v339 = vunpack.c.l.b16 %v134
    %v340 = vunpack.c.h.b16 %v134
    %v341 = vunpack.c.l.b16 %v135
    %v342 = vunpack.c.h.b16 %v135
    %v343 = vunpack.c.l.b16 %v136
    %v344 = vunpack.c.h.b16 %v136
    %v345 = vunpack.c.l.b16 %v137
    %v346 = vunpack.c.h.b16 %v137
    %v347 = vunpack.c.l.b16 %v138
    %v348 = vunpack.c.h.b16 %v138
    %v349 = vunpack.c.l.b16 %v139
    %v350 = vunpack.c.h.b16 %v139
    %v351 = vunpack.c.l.b16 %v140
    %v352 = vunpack.c.h.b16 %v140
    %v353 = vunpack.c.l.b16 %v141
    %v354 = vunpack.c.h.b16 %v141
    %v355 = vunpack.c.l.b16 %v142
    %v356 = vunpack.c.h.b16 %v142
    %v357 = vunpack.c.l.b16 %v143
    %v358 = vunpack.c.h.b16 %v143
    %v359 = vunpack.c.l.b16 %v144
    %v360 = vunpack.c.h.b16 %v144
    %v361 = vunpack.c.l.b16 %v145
    %v362 = vunpack.c.h.b16 %v145
    %v363 = vunpack.c.l.b16 %v146
    %v364 = vunpack.c.h.b16 %v146
    %v365 = vpack.c.b16 %v239, %v237
    %v366 = vpack.c.b16 %v240, %v238
    %v367 = vpack.c.b16 %v243, %v241
    %v368 = vpack.c.b16 %v244, %v242
    %v369 = vpack.c.b16 %v247, %v245
    %v370 = vpack.c.b16 %v248, %v246
    %v371 = vpack.c.b16 %v251, %v249
    %v372 = vpack.c.b16 %v252, %v250
    %v373 = vpack.c.b16 %v255, %v253
    %v374 = vpack.c.b16 %v256, %v254
    %v375 = vpack.c.b16 %v259, %v257
    %v376 = vpack.c.b16 %v260, %v258
    %v377 = vpack.c.b16 %v263, %v261
    %v378 = vpack.c.b16 %v264, %v262
    %v379 = vpack.c.b16 %v267, %v265
    %v380 = vpack.c.b16 %v268, %v266
    %v381 = vpack.c.b16 %v271, %v269
    %v382 = vpack.c.b16 %v272, %v270
    %v383 = vpack.c.b16 %v275, %v273
    %v384 = vpack.c.b16 %v276, %v274
    %v385 = vpack.c.b16 %v279, %v277
    %v386 = vpack.c.b16 %v280, %v278
    %v387 = vpack.c.b16 %v283, %v281
    %v388 = vpack.c.b16 %v284, %v282
    %v389 = vpack.c.b16 %v287, %v285
    %v390 = vpack.c.b16 %v288, %v286
    %v391 = vpack.c.b16 %v291, %v289
    %v392 = vpack.c.b16 %v292, %v290
    %v393 = vpack.c.b16 %v295, %v293
    %v394 = vpack.c.b16 %v296, %v294
    %v395 = vpack.c.b16 %v299, %v297
    %v396 = vpack.c.b16 %v300, %v298
    %v397 = vpack.c.b16 %v303, %v301
    %v398 = vpack.c.b16 %v304, %v302
    %v399 = vpack.c.b16 %v307, %v305
    %v400 = vpack.c.b16 %v308, %v306
    %v401 = vpack.c.b16 %v311, %v309
    %v402 = vpack.c.b16 %v312, %v310
    %v403 = vpack.c.b16 %v315, %v313
    %v404 = vpack.c.b16 %v316, %v314
    %v405 = vpack.c.b16 %v319, %v317
    %v406 = vpack.c.b16 %v320, %v318
    %v407 = vpack.c.b16 %v323, %v321
    %v408 = vpack.c.b16 %v324, %v322
    %v409 = vpack.c.b16 %v327, %v325
    %v410 = vpack.c.b16 %v328, %v326
    %v411 = vpack.c.b16 %v331, %v329
    %v412 = vpack.c.b16 %v332, %v330
    %v413 = vpack.c.b16 %v335, %v333
    %v414 = vpack.c.b16 %v336, %v334
    %v415 = vpack.c.b16 %v339, %v337
    %v416 = vpack.c.b16 %v340, %v338
    %v417 = vpack.c.b16 %v343, %v341
    %v418 = vpack.c.b16 %v344, %v342
    %v419 = vpack.c.b16 %v347, %v345
    %v420 = vpack.c.b16 %v348, %v346
    %v421 = vpack.c.b16 %v351, %v349
    %v422 = vpack.c.b16 %v352, %v350
    %v423 = vpack.c.b16 %v355, %v353
    %v424 = vpack.c.b16 %v356, %v354
    %v425 = vpack.c.b16 %v359, %v357
    %v426 = vpack.c.b16 %v360, %v358
    %v427 = vpack.c.b16 %v363, %v361
    %v428 = vpack.c.b16 %v364, %v362
    %493 = vmatprep.subr.bf16.mxu0 %v366
    %494 = vmatpush1.bf16.msra.mxu0 %v365
    %495 = vmatprep.subr.bf16.mxu0 %v368
    %496 = vmatpush1.bf16.msra.mxu0 %v367
    %497 = vmatprep.subr.bf16.mxu0 %v370
    %498 = vmatpush1.bf16.msra.mxu0 %v369
    %499 = vmatprep.subr.bf16.mxu0 %v372
    %500 = vmatpush1.bf16.msra.mxu0 %v371
    %501 = vmatprep.subr.bf16.mxu0 %v374
    %502 = vmatpush1.bf16.msra.mxu0 %v373
    %503 = vmatprep.subr.bf16.mxu0 %v376
    %504 = vmatpush1.bf16.msra.mxu0 %v375
    %505 = vmatprep.subr.bf16.mxu0 %v378
    %506 = vmatpush1.bf16.msra.mxu0 %v377
    %507 = vmatprep.subr.bf16.mxu0 %v380
    %508 = vmatpush1.bf16.msra.mxu0 %v379
    %509 = vmatprep.subr.bf16.mxu0 %v382
    %510 = vmatpush1.bf16.msra.mxu0 %v381
    %511 = vmatprep.subr.bf16.mxu0 %v384
    %512 = vmatpush1.bf16.msra.mxu0 %v383
    %513 = vmatprep.subr.bf16.mxu0 %v386
    %514 = vmatpush1.bf16.msra.mxu0 %v385
    %515 = vmatprep.subr.bf16.mxu0 %v388
    %516 = vmatpush1.bf16.msra.mxu0 %v387
    %517 = vmatprep.subr.bf16.mxu0 %v390
    %518 = vmatpush1.bf16.msra.mxu0 %v389
    %519 = vmatprep.subr.bf16.mxu0 %v392
    %520 = vmatpush1.bf16.msra.mxu0 %v391
    %521 = vmatprep.subr.bf16.mxu0 %v394
    %522 = vmatpush1.bf16.msra.mxu0 %v393
    %523 = vmatprep.subr.bf16.mxu0 %v396
    %524 = vmatpush1.bf16.msra.mxu0 %v395
    %525 = vmatprep.mubr.bf16.mxu0 %v166
    %526 = vmatmul.mubr.bf16.gmra.mrb[0].mxu0 %v165
    %v527 = vpop.f32.mrb[0].mxu0
    %v528 = vadd.f32 %v152, %v527
    %v529 = vpop.f32.mrb[0].mxu0
    %v530 = vadd.f32 %v156, %v529
    %v531 = vpop.f32.mrb[0].mxu0
    %v532 = vpop.f32.mrb[0].mxu0
    %533 = vdwg.mxu0
    %534 = vmatprep.subr.bf16.mxu0 %v398
    %535 = vmatpush1.bf16.msra.mxu0 %v397
    %536 = vmatprep.subr.bf16.mxu0 %v400
    %537 = vmatpush1.bf16.msra.mxu0 %v399
    %538 = vmatprep.subr.bf16.mxu0 %v402
    %539 = vmatpush1.bf16.msra.mxu0 %v401
    %540 = vmatprep.subr.bf16.mxu0 %v404
    %541 = vmatpush1.bf16.msra.mxu0 %v403
    %542 = vmatprep.subr.bf16.mxu0 %v406
    %543 = vmatpush1.bf16.msra.mxu0 %v405
    %544 = vmatprep.subr.bf16.mxu0 %v408
    %545 = vmatpush1.bf16.msra.mxu0 %v407
    %546 = vmatprep.subr.bf16.mxu0 %v410
    %547 = vmatpush1.bf16.msra.mxu0 %v409
    %548 = vmatprep.subr.bf16.mxu0 %v412
    %549 = vmatpush1.bf16.msra.mxu0 %v411
    %550 = vmatprep.subr.bf16.mxu0 %v414
    %551 = vmatpush1.bf16.msra.mxu0 %v413
    %552 = vmatprep.subr.bf16.mxu0 %v416
    %553 = vmatpush1.bf16.msra.mxu0 %v415
    %554 = vmatprep.subr.bf16.mxu0 %v418
    %555 = vmatpush1.bf16.msra.mxu0 %v417
    %556 = vmatprep.subr.bf16.mxu0 %v420
    %557 = vmatpush1.bf16.msra.mxu0 %v419
    %558 = vmatprep.subr.bf16.mxu0 %v422
    %559 = vmatpush1.bf16.msra.mxu0 %v421
    %560 = vmatprep.subr.bf16.mxu0 %v424
    %561 = vmatpush1.bf16.msra.mxu0 %v423
    %562 = vmatprep.subr.bf16.mxu0 %v426
    %563 = vmatpush1.bf16.msra.mxu0 %v425
    %564 = vmatprep.subr.bf16.mxu0 %v428
    %565 = vmatpush1.bf16.msra.mxu0 %v427
    %566 = vmatprep.mubr.bf16.mxu0 %v168
    %567 = vmatmul.mubr.bf16.gmra.mrb[0].mxu0 %v167
    %v568 = vpop.f32.mrb[0].mxu0
    %v569 = vadd.f32 %v528, %v568
    %v570 = vpop.f32.mrb[0].mxu0
    %v571 = vadd.f32 %v530, %v570
    %v572 = vpop.f32.mrb[0].mxu0
    %v573 = vpop.f32.mrb[0].mxu0
    %574 = vdwg.mxu0
    %v575 = vmax.f32 %v569, 0.0
    %v576 = vmax.f32 %v571, 0.0
    %v577 = vpack.c.bf16 %v575, %v575
    %v578 = vpack.c.bf16 %v576, %v576
    %v579 = vld [vmem:[#allocation7] sm:$0xf]
    %v580 = vld [vmem:[#allocation7 + $0x4] sm:$0xf]
    %v581 = vld [vmem:[#allocation7 + $0x8] sm:$0xf]
    %v582 = vld [vmem:[#allocation7 + $0xc] sm:$0xf]
    %v583 = vld [vmem:[#allocation7 + $0x10] sm:$0xf]
    %v584 = vld [vmem:[#allocation7 + $0x14] sm:$0xf]
    %v585 = vld [vmem:[#allocation7 + $0x18] sm:$0xf]
    %v586 = vld [vmem:[#allocation7 + $0x1c] sm:$0xf]
    %v587 = vld [vmem:[#allocation7 + $0x20] sm:$0xf]
    %v588 = vld [vmem:[#allocation7 + $0x24] sm:$0xf]
    %v589 = vld [vmem:[#allocation7 + $0x28] sm:$0xf]
    %v590 = vld [vmem:[#allocation7 + $0x2c] sm:$0xf]
    %v591 = vld [vmem:[#allocation7 + $0x30] sm:$0xf]
    %v592 = vld [vmem:[#allocation7 + $0x34] sm:$0xf]
    %v593 = vld [vmem:[#allocation7 + $0x38] sm:$0xf]
    %v594 = vld [vmem:[#allocation7 + $0x3c] sm:$0xf]
    %v595 = vld [vmem:[#allocation7 + $0x40] sm:$0xf]
    %v596 = vld [vmem:[#allocation7 + $0x44] sm:$0xf]
    %v597 = vld [vmem:[#allocation7 + $0x48] sm:$0xf]
    %v598 = vld [vmem:[#allocation7 + $0x4c] sm:$0xf]
    %v599 = vld [vmem:[#allocation7 + $0x50] sm:$0xf]
    %v600 = vld [vmem:[#allocation7 + $0x54] sm:$0xf]
    %v601 = vld [vmem:[#allocation7 + $0x58] sm:$0xf]
    %v602 = vld [vmem:[#allocation7 + $0x5c] sm:$0xf]
    %v603 = vld [vmem:[#allocation7 + $0x60] sm:$0xf]
    %v604 = vld [vmem:[#allocation7 + $0x64] sm:$0xf]
    %v605 = vld [vmem:[#allocation7 + $0x68] sm:$0xf]
    %v606 = vld [vmem:[#allocation7 + $0x6c] sm:$0xf]
    %v607 = vld [vmem:[#allocation7 + $0x70] sm:$0xf]
    %v608 = vld [vmem:[#allocation7 + $0x74] sm:$0xf]
    %v609 = vld [vmem:[#allocation7 + $0x78] sm:$0xf]
    %v610 = vld [vmem:[#allocation7 + $0x7c] sm:$0xf]
    %v611 = vld [vmem:[%s4] sm:$0x1]
    %v613 = vlaneseq
    %v614 = vshrl.u32 %v613, 7
    %v615 = vsub.s32 0, %v614
    %v616 = vrot.slane %v611, %v615
    %v650 = vunpack.c.l.b16 %v579
    %v651 = vunpack.c.l.b16 %v580
    %v652 = vunpack.c.l.b16 %v581
    %v653 = vunpack.c.l.b16 %v582
    %v654 = vunpack.c.l.b16 %v583
    %v655 = vunpack.c.l.b16 %v584
    %v656 = vunpack.c.l.b16 %v585
    %v657 = vunpack.c.l.b16 %v586
    %v658 = vunpack.c.l.b16 %v587
    %v659 = vunpack.c.l.b16 %v588
    %v660 = vunpack.c.l.b16 %v589
    %v661 = vunpack.c.l.b16 %v590
    %v662 = vunpack.c.l.b16 %v591
    %v663 = vunpack.c.l.b16 %v592
    %v664 = vunpack.c.l.b16 %v593
    %v665 = vunpack.c.l.b16 %v594
    %v666 = vunpack.c.l.b16 %v595
    %v667 = vunpack.c.l.b16 %v596
    %v668 = vunpack.c.l.b16 %v597
    %v669 = vunpack.c.l.b16 %v598
    %v670 = vunpack.c.l.b16 %v599
    %v671 = vunpack.c.l.b16 %v600
    %v672 = vunpack.c.l.b16 %v601
    %v673 = vunpack.c.l.b16 %v602
    %v674 = vunpack.c.l.b16 %v603
    %v675 = vunpack.c.l.b16 %v604
    %v676 = vunpack.c.l.b16 %v605
    %v677 = vunpack.c.l.b16 %v606
    %v678 = vunpack.c.l.b16 %v607
    %v679 = vunpack.c.l.b16 %v608
    %v680 = vunpack.c.l.b16 %v609
    %v681 = vunpack.c.l.b16 %v610
    %v682 = vpack.c.b16 %v651, %v650
    %v683 = vpack.c.b16 %v653, %v652
    %v684 = vpack.c.b16 %v655, %v654
    %v685 = vpack.c.b16 %v657, %v656
    %v686 = vpack.c.b16 %v659, %v658
    %v687 = vpack.c.b16 %v661, %v660
    %v688 = vpack.c.b16 %v663, %v662
    %v689 = vpack.c.b16 %v665, %v664
    %v690 = vpack.c.b16 %v667, %v666
    %v691 = vpack.c.b16 %v669, %v668
    %v692 = vpack.c.b16 %v671, %v670
    %v693 = vpack.c.b16 %v673, %v672
    %v694 = vpack.c.b16 %v675, %v674
    %v695 = vpack.c.b16 %v677, %v676
    %v696 = vpack.c.b16 %v679, %v678
    %v697 = vpack.c.b16 %v681, %v680
    %714 = vmatprep.subr.bf16.mxu0 0
    %715 = vmatpush1.bf16.msra.mxu0 %v682
    %716 = vmatprep.subr.bf16.mxu0 0
    %717 = vmatpush1.bf16.msra.mxu0 %v683
    %718 = vmatprep.subr.bf16.mxu0 0
    %719 = vmatpush1.bf16.msra.mxu0 %v684
    %720 = vmatprep.subr.bf16.mxu0 0
    %721 = vmatpush1.bf16.msra.mxu0 %v685
    %722 = vmatprep.subr.bf16.mxu0 0
    %723 = vmatpush1.bf16.msra.mxu0 %v686
    %724 = vmatprep.subr.bf16.mxu0 0
    %725 = vmatpush1.bf16.msra.mxu0 %v687
    %726 = vmatprep.subr.bf16.mxu0 0
    %727 = vmatpush1.bf16.msra.mxu0 %v688
    %728 = vmatprep.subr.bf16.mxu0 0
    %729 = vmatpush1.bf16.msra.mxu0 %v689
    %730 = vmatprep.subr.bf16.mxu0 0
    %731 = vmatpush1.bf16.msra.mxu0 %v690
    %732 = vmatprep.subr.bf16.mxu0 0
    %733 = vmatpush1.bf16.msra.mxu0 %v691
    %734 = vmatprep.subr.bf16.mxu0 0
    %735 = vmatpush1.bf16.msra.mxu0 %v692
    %736 = vmatprep.subr.bf16.mxu0 0
    %737 = vmatpush1.bf16.msra.mxu0 %v693
    %738 = vmatprep.subr.bf16.mxu0 0
    %739 = vmatpush1.bf16.msra.mxu0 %v694
    %740 = vmatprep.subr.bf16.mxu0 0
    %741 = vmatpush1.bf16.msra.mxu0 %v695
    %742 = vmatprep.subr.bf16.mxu0 0
    %743 = vmatpush1.bf16.msra.mxu0 %v696
    %744 = vmatprep.subr.bf16.mxu0 0
    %745 = vmatpush1.bf16.msra.mxu0 %v697
    %746 = vmatprep.mubr.bf16.mxu0 %v578
    %747 = vmatmul.mubr.bf16.gmra.mrb[0].mxu0 %v577
    %v748 = vpop.f32.mrb[0].mxu0
    %v749 = vadd.f32 %v616, %v748
    %v750 = vpop.f32.mrb[0].mxu0
    %v751 = vpop.f32.mrb[0].mxu0
    %v752 = vpop.f32.mrb[0].mxu0
    %753 = vdwg.mxu0
    %v754 = vmax.f32 %v749, 0.0
    %v755 = vpack.c.bf16 %v754, %v754
    %v756 = vld [vmem:[#allocation8] sm:$0xf]
    %v757 = vld [vmem:[#allocation8 + $0x4] sm:$0xf]
    %v758 = vld [vmem:[#allocation8 + $0x8] sm:$0xf]
    %v759 = vld [vmem:[#allocation8 + $0xc] sm:$0xf]
    %v760 = vld [vmem:[#allocation8 + $0x10] sm:$0xf]
    %v761 = vld [vmem:[#allocation8 + $0x14] sm:$0xf]
    %v762 = vld [vmem:[#allocation8 + $0x18] sm:$0xf]
    %v763 = vld [vmem:[#allocation8 + $0x1c] sm:$0xf]
    %v764 = vld [vmem:[#allocation8 + $0x20] sm:$0xf]
    %v765 = vld [vmem:[#allocation8 + $0x24] sm:$0xf]
    %v766 = vld [vmem:[#allocation8 + $0x28] sm:$0xf]
    %v767 = vld [vmem:[#allocation8 + $0x2c] sm:$0xf]
    %v768 = vld [vmem:[#allocation8 + $0x30] sm:$0xf]
    %v769 = vld [vmem:[#allocation8 + $0x34] sm:$0xf]
    %v770 = vld [vmem:[#allocation8 + $0x38] sm:$0xf]
    %v771 = vld [vmem:[#allocation8 + $0x3c] sm:$0xf]
    %v772 = vld [vmem:[%s6] sm:$0x1]
    %v774 = vlaneseq
    %v775 = vshrl.u32 %v774, 7
    %v776 = vsub.s32 0, %v775
    %v777 = vrot.slane %v772, %v776
    %v795 = vunpack.c.l.b16 %v756
    %v796 = vunpack.c.l.b16 %v757
    %v797 = vunpack.c.l.b16 %v758
    %v798 = vunpack.c.l.b16 %v759
    %v799 = vunpack.c.l.b16 %v760
    %v800 = vunpack.c.l.b16 %v761
    %v801 = vunpack.c.l.b16 %v762
    %v802 = vunpack.c.l.b16 %v763
    %v803 = vunpack.c.l.b16 %v764
    %v804 = vunpack.c.l.b16 %v765
    %v805 = vunpack.c.l.b16 %v766
    %v806 = vunpack.c.l.b16 %v767
    %v807 = vunpack.c.l.b16 %v768
    %v808 = vunpack.c.l.b16 %v769
    %v809 = vunpack.c.l.b16 %v770
    %v810 = vunpack.c.l.b16 %v771
    %v811 = vpack.c.b16 %v796, %v795
    %v812 = vpack.c.b16 %v798, %v797
    %v813 = vpack.c.b16 %v800, %v799
    %v814 = vpack.c.b16 %v802, %v801
    %v815 = vpack.c.b16 %v804, %v803
    %v816 = vpack.c.b16 %v806, %v805
    %v817 = vpack.c.b16 %v808, %v807
    %v818 = vpack.c.b16 %v810, %v809
    %827 = vmatprep.subr.bf16.mxu0 0
    %828 = vmatpush1.bf16.msra.mxu0 %v811
    %829 = vmatprep.subr.bf16.mxu0 0
    %830 = vmatpush1.bf16.msra.mxu0 %v812
    %831 = vmatprep.subr.bf16.mxu0 0
    %832 = vmatpush1.bf16.msra.mxu0 %v813
    %833 = vmatprep.subr.bf16.mxu0 0
    %834 = vmatpush1.bf16.msra.mxu0 %v814
    %835 = vmatprep.subr.bf16.mxu0 0
    %836 = vmatpush1.bf16.msra.mxu0 %v815
    %837 = vmatprep.subr.bf16.mxu0 0
    %838 = vmatpush1.bf16.msra.mxu0 %v816
    %839 = vmatprep.subr.bf16.mxu0 0
    %840 = vmatpush1.bf16.msra.mxu0 %v817
    %841 = vmatprep.subr.bf16.mxu0 0
    %842 = vmatpush1.bf16.msra.mxu0 %v818
    %843 = vmatprep.subr.bf16.mxu0 0
    %844 = vmatpush1.bf16.msra.mxu0 0
    %845 = vmatprep.subr.bf16.mxu0 0
    %846 = vmatpush1.bf16.msra.mxu0 0
    %847 = vmatprep.subr.bf16.mxu0 0
    %848 = vmatpush1.bf16.msra.mxu0 0
    %849 = vmatprep.subr.bf16.mxu0 0
    %850 = vmatpush1.bf16.msra.mxu0 0
    %851 = vmatprep.subr.bf16.mxu0 0
    %852 = vmatpush1.bf16.msra.mxu0 0
    %853 = vmatprep.subr.bf16.mxu0 0
    %854 = vmatpush1.bf16.msra.mxu0 0
    %855 = vmatprep.subr.bf16.mxu0 0
    %856 = vmatpush1.bf16.msra.mxu0 0
    %857 = vmatprep.subr.bf16.mxu0 0
    %858 = vmatpush1.bf16.msra.mxu0 0
    %859 = vmatprep.mubr.bf16.mxu0 0
    %860 = vmatmul.mubr.bf16.gmra.mrb[0].mxu0 %v755
    %v861 = vpop.f32.mrb[0].mxu0
    %v862 = vadd.f32 %v777, %v861
    %v863 = vpop.f32.mrb[0].mxu0
    %v864 = vpop.f32.mrb[0].mxu0
    %v865 = vpop.f32.mrb[0].mxu0
    %866 = vdwg.mxu0
    %v867 = vmax.f32 %v862, 0.0
    %v868 = vpack.c.bf16 %v867, %v867
    %s869 = scalar_lea.vmem [#allocation8], 64
    %v870 = vld [vmem:[%s869] sm:$0xf]
    %v871 = vld [vmem:[%s869 + $0x4] sm:$0xf]
    %v872 = vld [vmem:[%s869 + $0x8] sm:$0xf]
    %v873 = vld [vmem:[%s869 + $0xc] sm:$0xf]
    %v874 = vld [vmem:[%s869 + $0x10] sm:$0xf]
    %v875 = vld [vmem:[%s869 + $0x14] sm:$0xf]
    %v876 = vld [vmem:[%s869 + $0x18] sm:$0xf]
    %v877 = vld [vmem:[%s869 + $0x1c] sm:$0xf]
    %v878 = vld [vmem:[%s869 + $0x20] sm:$0xf]
    %v879 = vld [vmem:[%s869 + $0x24] sm:$0xf]
    %v880 = vld [vmem:[%s869 + $0x28] sm:$0xf]
    %v881 = vld [vmem:[%s869 + $0x2c] sm:$0xf]
    %v882 = vld [vmem:[%s869 + $0x30] sm:$0xf]
    %v883 = vld [vmem:[%s869 + $0x34] sm:$0xf]
    %v884 = vld [vmem:[%s869 + $0x38] sm:$0xf]
    %v885 = vld [vmem:[%s869 + $0x3c] sm:$0xf]
    %s886 = scalar_lea.vmem %s6, 1
    %v887 = vld [vmem:[%s886] sm:$0x1]
    %v889 = vlaneseq
    %v890 = vshrl.u32 %v889, 7
    %v891 = vsub.s32 0, %v890
    %v892 = vrot.slane %v887, %v891
    %v910 = vunpack.c.l.b16 %v870
    %v911 = vunpack.c.l.b16 %v871
    %v912 = vunpack.c.l.b16 %v872
    %v913 = vunpack.c.l.b16 %v873
    %v914 = vunpack.c.l.b16 %v874
    %v915 = vunpack.c.l.b16 %v875
    %v916 = vunpack.c.l.b16 %v876
    %v917 = vunpack.c.l.b16 %v877
    %v918 = vunpack.c.l.b16 %v878
    %v919 = vunpack.c.l.b16 %v879
    %v920 = vunpack.c.l.b16 %v880
    %v921 = vunpack.c.l.b16 %v881
    %v922 = vunpack.c.l.b16 %v882
    %v923 = vunpack.c.l.b16 %v883
    %v924 = vunpack.c.l.b16 %v884
    %v925 = vunpack.c.l.b16 %v885
    %v926 = vpack.c.b16 %v911, %v910
    %v927 = vpack.c.b16 %v913, %v912
    %v928 = vpack.c.b16 %v915, %v914
    %v929 = vpack.c.b16 %v917, %v916
    %v930 = vpack.c.b16 %v919, %v918
    %v931 = vpack.c.b16 %v921, %v920
    %v932 = vpack.c.b16 %v923, %v922
    %v933 = vpack.c.b16 %v925, %v924
    %942 = vmatprep.subr.bf16.mxu0 0
    %943 = vmatpush1.bf16.msra.mxu0 %v926
    %944 = vmatprep.subr.bf16.mxu0 0
    %945 = vmatpush1.bf16.msra.mxu0 %v927
    %946 = vmatprep.subr.bf16.mxu0 0
    %947 = vmatpush1.bf16.msra.mxu0 %v928
    %948 = vmatprep.subr.bf16.mxu0 0
    %949 = vmatpush1.bf16.msra.mxu0 %v929
    %950 = vmatprep.subr.bf16.mxu0 0
    %951 = vmatpush1.bf16.msra.mxu0 %v930
    %952 = vmatprep.subr.bf16.mxu0 0
    %953 = vmatpush1.bf16.msra.mxu0 %v931
    %954 = vmatprep.subr.bf16.mxu0 0
    %955 = vmatpush1.bf16.msra.mxu0 %v932
    %956 = vmatprep.subr.bf16.mxu0 0
    %957 = vmatpush1.bf16.msra.mxu0 %v933
    %958 = vmatprep.subr.bf16.mxu0 0
    %959 = vmatpush1.bf16.msra.mxu0 0
    %960 = vmatprep.subr.bf16.mxu0 0
    %961 = vmatpush1.bf16.msra.mxu0 0
    %962 = vmatprep.subr.bf16.mxu0 0
    %963 = vmatpush1.bf16.msra.mxu0 0
    %964 = vmatprep.subr.bf16.mxu0 0
    %965 = vmatpush1.bf16.msra.mxu0 0
    %966 = vmatprep.subr.bf16.mxu0 0
    %967 = vmatpush1.bf16.msra.mxu0 0
    %968 = vmatprep.subr.bf16.mxu0 0
    %969 = vmatpush1.bf16.msra.mxu0 0
    %970 = vmatprep.subr.bf16.mxu0 0
    %971 = vmatpush1.bf16.msra.mxu0 0
    %972 = vmatprep.subr.bf16.mxu0 0
    %973 = vmatpush1.bf16.msra.mxu0 0
    %974 = vmatprep.mubr.bf16.mxu0 0
    %975 = vmatmul.mubr.bf16.gmra.mrb[0].mxu0 %v868
    %v976 = vpop.f32.mrb[0].mxu0
    %v977 = vadd.f32 %v892, %v976
    %v978 = vpop.f32.mrb[0].mxu0
    %v979 = vpop.f32.mrb[0].mxu0
    %v980 = vpop.f32.mrb[0].mxu0
    %981 = vdwg.mxu0
    %v982 = vmax.f32 %v977, 0.0
    %v983 = vpack.c.bf16 %v982, %v982
    %s984 = scalar_lea.vmem [#allocation8], 128
    %v985 = vld [vmem:[%s984] sm:$0xf]
    %v986 = vld [vmem:[%s984 + $0x4] sm:$0xf]
    %v987 = vld [vmem:[%s984 + $0x8] sm:$0xf]
    %v988 = vld [vmem:[%s984 + $0xc] sm:$0xf]
    %v989 = vld [vmem:[%s984 + $0x10] sm:$0xf]
    %v990 = vld [vmem:[%s984 + $0x14] sm:$0xf]
    %v991 = vld [vmem:[%s984 + $0x18] sm:$0xf]
    %v992 = vld [vmem:[%s984 + $0x1c] sm:$0xf]
    %v993 = vld [vmem:[%s984 + $0x20] sm:$0xf]
    %v994 = vld [vmem:[%s984 + $0x24] sm:$0xf]
    %v995 = vld [vmem:[%s984 + $0x28] sm:$0xf]
    %v996 = vld [vmem:[%s984 + $0x2c] sm:$0xf]
    %v997 = vld [vmem:[%s984 + $0x30] sm:$0xf]
    %v998 = vld [vmem:[%s984 + $0x34] sm:$0xf]
    %v999 = vld [vmem:[%s984 + $0x38] sm:$0xf]
    %v1000 = vld [vmem:[%s984 + $0x3c] sm:$0xf]
    %s1001 = scalar_lea.vmem %s6, 2
    %v1002 = vld [vmem:[%s1001] sm:$0x1]
    %v1004 = vlaneseq
    %v1005 = vshrl.u32 %v1004, 7
    %v1006 = vsub.s32 0, %v1005
    %v1007 = vrot.slane %v1002, %v1006
    %v1025 = vunpack.c.l.b16 %v985
    %v1026 = vunpack.c.l.b16 %v986
    %v1027 = vunpack.c.l.b16 %v987
    %v1028 = vunpack.c.l.b16 %v988
    %v1029 = vunpack.c.l.b16 %v989
    %v1030 = vunpack.c.l.b16 %v990
    %v1031 = vunpack.c.l.b16 %v991
    %v1032 = vunpack.c.l.b16 %v992
    %v1033 = vunpack.c.l.b16 %v993
    %v1034 = vunpack.c.l.b16 %v994
    %v1035 = vunpack.c.l.b16 %v995
    %v1036 = vunpack.c.l.b16 %v996
    %v1037 = vunpack.c.l.b16 %v997
    %v1038 = vunpack.c.l.b16 %v998
    %v1039 = vunpack.c.l.b16 %v999
    %v1040 = vunpack.c.l.b16 %v1000
    %v1041 = vpack.c.b16 %v1026, %v1025
    %v1042 = vpack.c.b16 %v1028, %v1027
    %v1043 = vpack.c.b16 %v1030, %v1029
    %v1044 = vpack.c.b16 %v1032, %v1031
    %v1045 = vpack.c.b16 %v1034, %v1033
    %v1046 = vpack.c.b16 %v1036, %v1035
    %v1047 = vpack.c.b16 %v1038, %v1037
    %v1048 = vpack.c.b16 %v1040, %v1039
    %1057 = vmatprep.subr.bf16.mxu0 0
    %1058 = vmatpush1.bf16.msra.mxu0 %v1041
    %1059 = vmatprep.subr.bf16.mxu0 0
    %1060 = vmatpush1.bf16.msra.mxu0 %v1042
    %1061 = vmatprep.subr.bf16.mxu0 0
    %1062 = vmatpush1.bf16.msra.mxu0 %v1043
    %1063 = vmatprep.subr.bf16.mxu0 0
    %1064 = vmatpush1.bf16.msra.mxu0 %v1044
    %1065 = vmatprep.subr.bf16.mxu0 0
    %1066 = vmatpush1.bf16.msra.mxu0 %v1045
    %1067 = vmatprep.subr.bf16.mxu0 0
    %1068 = vmatpush1.bf16.msra.mxu0 %v1046
    %1069 = vmatprep.subr.bf16.mxu0 0
    %1070 = vmatpush1.bf16.msra.mxu0 %v1047
    %1071 = vmatprep.subr.bf16.mxu0 0
    %1072 = vmatpush1.bf16.msra.mxu0 %v1048
    %1073 = vmatprep.subr.bf16.mxu0 0
    %1074 = vmatpush1.bf16.msra.mxu0 0
    %1075 = vmatprep.subr.bf16.mxu0 0
    %1076 = vmatpush1.bf16.msra.mxu0 0
    %1077 = vmatprep.subr.bf16.mxu0 0
    %1078 = vmatpush1.bf16.msra.mxu0 0
    %1079 = vmatprep.subr.bf16.mxu0 0
    %1080 = vmatpush1.bf16.msra.mxu0 0
    %1081 = vmatprep.subr.bf16.mxu0 0
    %1082 = vmatpush1.bf16.msra.mxu0 0
    %1083 = vmatprep.subr.bf16.mxu0 0
    %1084 = vmatpush1.bf16.msra.mxu0 0
    %1085 = vmatprep.subr.bf16.mxu0 0
    %1086 = vmatpush1.bf16.msra.mxu0 0
    %1087 = vmatprep.subr.bf16.mxu0 0
    %1088 = vmatpush1.bf16.msra.mxu0 0
    %1089 = vmatprep.mubr.bf16.mxu0 0
    %1090 = vmatmul.mubr.bf16.gmra.mrb[0].mxu0 %v983
    %v1091 = vpop.f32.mrb[0].mxu0
    %v1092 = vadd.f32 %v1007, %v1091
    %v1093 = vpop.f32.mrb[0].mxu0
    %v1094 = vpop.f32.mrb[0].mxu0
    %v1095 = vpop.f32.mrb[0].mxu0
    %1096 = vdwg.mxu0
    %v1097 = vmax.f32 %v1092, 0.0
    %v1098 = vpack.c.bf16 %v1097, %v1097
    %s1099 = scalar_lea.vmem [#allocation8], 192
    %v1100 = vld [vmem:[%s1099] sm:$0xf]
    %v1101 = vld [vmem:[%s1099 + $0x4] sm:$0xf]
    %v1102 = vld [vmem:[%s1099 + $0x8] sm:$0xf]
    %v1103 = vld [vmem:[%s1099 + $0xc] sm:$0xf]
    %v1104 = vld [vmem:[%s1099 + $0x10] sm:$0xf]
    %v1105 = vld [vmem:[%s1099 + $0x14] sm:$0xf]
    %v1106 = vld [vmem:[%s1099 + $0x18] sm:$0xf]
    %v1107 = vld [vmem:[%s1099 + $0x1c] sm:$0xf]
    %v1108 = vld [vmem:[%s1099 + $0x20] sm:$0xf]
    %v1109 = vld [vmem:[%s1099 + $0x24] sm:$0xf]
    %v1110 = vld [vmem:[%s1099 + $0x28] sm:$0xf]
    %v1111 = vld [vmem:[%s1099 + $0x2c] sm:$0xf]
    %v1112 = vld [vmem:[%s1099 + $0x30] sm:$0xf]
    %v1113 = vld [vmem:[%s1099 + $0x34] sm:$0xf]
    %v1114 = vld [vmem:[%s1099 + $0x38] sm:$0xf]
    %v1115 = vld [vmem:[%s1099 + $0x3c] sm:$0xf]
    %s1116 = scalar_lea.vmem %s6, 3
    %v1117 = vld [vmem:[%s1116] sm:$0x1]
    %v1119 = vlaneseq
    %v1120 = vshrl.u32 %v1119, 7
    %v1121 = vsub.s32 0, %v1120
    %v1122 = vrot.slane %v1117, %v1121
    %v1140 = vunpack.c.l.b16 %v1100
    %v1141 = vunpack.c.l.b16 %v1101
    %v1142 = vunpack.c.l.b16 %v1102
    %v1143 = vunpack.c.l.b16 %v1103
    %v1144 = vunpack.c.l.b16 %v1104
    %v1145 = vunpack.c.l.b16 %v1105
    %v1146 = vunpack.c.l.b16 %v1106
    %v1147 = vunpack.c.l.b16 %v1107
    %v1148 = vunpack.c.l.b16 %v1108
    %v1149 = vunpack.c.l.b16 %v1109
    %v1150 = vunpack.c.l.b16 %v1110
    %v1151 = vunpack.c.l.b16 %v1111
    %v1152 = vunpack.c.l.b16 %v1112
    %v1153 = vunpack.c.l.b16 %v1113
    %v1154 = vunpack.c.l.b16 %v1114
    %v1155 = vunpack.c.l.b16 %v1115
    %v1156 = vpack.c.b16 %v1141, %v1140
    %v1157 = vpack.c.b16 %v1143, %v1142
    %v1158 = vpack.c.b16 %v1145, %v1144
    %v1159 = vpack.c.b16 %v1147, %v1146
    %v1160 = vpack.c.b16 %v1149, %v1148
    %v1161 = vpack.c.b16 %v1151, %v1150
    %v1162 = vpack.c.b16 %v1153, %v1152
    %v1163 = vpack.c.b16 %v1155, %v1154
    %1172 = vmatprep.subr.bf16.mxu0 0
    %1173 = vmatpush1.bf16.msra.mxu0 %v1156
    %1174 = vmatprep.subr.bf16.mxu0 0
    %1175 = vmatpush1.bf16.msra.mxu0 %v1157
    %1176 = vmatprep.subr.bf16.mxu0 0
    %1177 = vmatpush1.bf16.msra.mxu0 %v1158
    %1178 = vmatprep.subr.bf16.mxu0 0
    %1179 = vmatpush1.bf16.msra.mxu0 %v1159
    %1180 = vmatprep.subr.bf16.mxu0 0
    %1181 = vmatpush1.bf16.msra.mxu0 %v1160
    %1182 = vmatprep.subr.bf16.mxu0 0
    %1183 = vmatpush1.bf16.msra.mxu0 %v1161
    %1184 = vmatprep.subr.bf16.mxu0 0
    %1185 = vmatpush1.bf16.msra.mxu0 %v1162
    %1186 = vmatprep.subr.bf16.mxu0 0
    %1187 = vmatpush1.bf16.msra.mxu0 %v1163
    %1188 = vmatprep.subr.bf16.mxu0 0
    %1189 = vmatpush1.bf16.msra.mxu0 0
    %1190 = vmatprep.subr.bf16.mxu0 0
    %1191 = vmatpush1.bf16.msra.mxu0 0
    %1192 = vmatprep.subr.bf16.mxu0 0
    %1193 = vmatpush1.bf16.msra.mxu0 0
    %1194 = vmatprep.subr.bf16.mxu0 0
    %1195 = vmatpush1.bf16.msra.mxu0 0
    %1196 = vmatprep.subr.bf16.mxu0 0
    %1197 = vmatpush1.bf16.msra.mxu0 0
    %1198 = vmatprep.subr.bf16.mxu0 0
    %1199 = vmatpush1.bf16.msra.mxu0 0
    %1200 = vmatprep.subr.bf16.mxu0 0
    %1201 = vmatpush1.bf16.msra.mxu0 0
    %1202 = vmatprep.subr.bf16.mxu0 0
    %1203 = vmatpush1.bf16.msra.mxu0 0
    %1204 = vmatprep.mubr.bf16.mxu0 0
    %1205 = vmatmul.mubr.bf16.gmra.mrb[0].mxu0 %v1098
    %v1206 = vpop.f32.mrb[0].mxu0
    %v1207 = vadd.f32 %v1122, %v1206
    %v1208 = vpop.f32.mrb[0].mxu0
    %v1209 = vpop.f32.mrb[0].mxu0
    %v1210 = vpop.f32.mrb[0].mxu0
    %1211 = vdwg.mxu0
    %1212 = vst [vmem:[#allocation10] sm:$0xff] %v1207
    // Predicated region
    $region46: #{tpu_custom_call.1} parent=1 // pred_check
      _
    $region47: #{tpu_custom_call.1} parent=1 // pred_check_branch
      %1214 = sbr.rel (0) target = $region49
    $region48: #{tpu_custom_call.1} parent=1 // pred_region
      %s1216 = ssub.s32 128, 128
      %1217 = vsyncadd [#allocation4], %s1216
      %s1219 = sshll.u32 [#allocation10], 4
      %s1220 = int_to_ptr.vmem [resolvable:$true] %s1219
      %1222 = dma.vmem_to_hbm [thread:$0]  %s1220, 128, %s7, [#allocation4]
    $region49: #{tpu_custom_call.1} parent=1 // pred_fallthru
      _
    // Predicated region
    $region50: #{tpu_custom_call.1} parent=1 // pred_check
      _
    $region51: #{tpu_custom_call.1} parent=1 // pred_check_branch
      %1224 = sbr.rel (0) target = $region53
    $region52: #{tpu_custom_call.1} parent=1 // pred_region
      %1225 = dma.done [#allocation4], 128
    $region53: #{tpu_custom_call.1} parent=1 // pred_fallthru
      _
    %1226 = vsyncpa [#allocation3], 1
    %1227 = vsyncpa [#allocation6], 1
    %1228 = vsyncpa [#allocation9], 1
    %1229 = vsyncpa [#allocation4], 1

</llo_original>
